<compile_context>
chip_gen: v7x
topology: tpu7x:2x2x1
jax: 0.10.0
libtpu: 0.0.40
codegen_flags: <defaults>
</compile_context>

<pallas_src>
import functools

import jax
import jax.numpy as jnp
import numpy as np
from jax import lax
from jax.experimental import pallas as pl
from jax.experimental.pallas import tpu as pltpu

EPS_BN = 1e-5   # nn.BatchNorm1d default eps
EPS_W = 1e-8    # PointNetFeaturePropagation weight eps


def _pick_tile(n, target, mult=8):
    """Largest tile t <= target with n % t == 0 and (t % mult == 0 or t == n)."""
    t = min(n, target)
    while t > 0:
        if n % t == 0 and (t % mult == 0 or t == n):
            return t
        t -= 1
    return n


def _tile_candidates(n, mult):
    """All valid tiles of n (multiples of `mult`, or the full extent), descending."""
    return sorted([t for t in range(1, n + 1) if n % t == 0 and (t % mult == 0 or t == n)],
                  reverse=True)


def _vmem_capacity_bytes():
    """Physical VMEM per TensorCore; conservative (v7x) fallback if the query fails."""
    try:
        cap = getattr(pltpu.get_tpu_info(), "vmem_capacity_bytes", None)
        if cap:
            return int(cap)
    except Exception:
        pass
    return 64 * 2 ** 20


def _linear_stats_kernel(x_ref, w_ref, z_ref, stats_ref):
    """z = x @ W (bias omitted: cancels in train-mode BN); per-tile partial sum / sumsq."""
    z = jnp.dot(x_ref[...], w_ref[...], preferred_element_type=jnp.float32)
    z_ref[...] = z.astype(z_ref.dtype)          # bf16 store: halves z1/z2 HBM write+read bytes
    stats_ref[...] = jnp.concatenate(
        [jnp.sum(z, axis=0, keepdims=True),
         jnp.sum(z * z, axis=0, keepdims=True)], axis=0)


def _interp_kernel(K, low_bits, z1_ref, z2_ref, dst_ref, srcT_ref, bn_ref, out_ref, f1_ref):
    # z1_ref:  (N1, Cp)  bf16 pre-BN features at source (xyz1) points, resident per batch
    # z2_ref:  (tn2, Cp) bf16 pre-BN features at destination (xyz2) points, this tile
    # dst_ref: (tn2, 8)  [x, y, z, |p|^2, 1, 0, 0, 0]
    # srcT_ref:(8, N1)   [-2x, -2y, -2z, 1, |q|^2, 0, 0, 0]^T  => dst @ srcT == squared distance
    # bn_ref:  (4, Cp)   rows: scale1, shift1, scale2, shift2 (gamma folded into BN scale)
    # f1_ref:  (N1, Cp)  bf16 VMEM scratch: relu(BN(z1)) cached once per batch
    bn = bn_ref[...]

    @pl.when(pl.program_id(1) == 0)            # valid: tile axis is "arbitrary" (sequential)
    def _():
        z1 = z1_ref[...].astype(jnp.float32)   # BN affine kept in f32 (no bf16 VPU on v5e)
        f1_ref[...] = jnp.maximum(z1 * bn[0:1, :] + bn[1:2, :], 0.0).astype(f1_ref.dtype)

    f2 = jnp.maximum(z2_ref[...].astype(jnp.float32) * bn[2:3, :] + bn[3:4, :], 0.0)

    # Squared distances: small K=8 matmul, kept in f32 for precision.
    d = jnp.dot(dst_ref[...], srcT_ref[...], preferred_element_type=jnp.float32)  # (tn2, N1)
    d = jnp.maximum(d, 0.0)   # clamp f32 cancellation negatives for near-coincident points

    # Pack (distance, column) into one monotone int32 key: one lane-min per neighbour.
    # Keys are unique per column (the column id lives in the low bits), so exactly one
    # column matches per row per iteration — no duplicate-distance over-weighting.
    col = lax.broadcasted_iota(jnp.int32, d.shape, 1)
    keep = jnp.int32(~((1 << low_bits) - 1))
    keys = (pltpu.bitcast(d, jnp.int32) & keep) | col
    sentinel = jnp.int32(2147483647)

    sel = jnp.zeros(d.shape, jnp.float32)          # weighted selection matrix (f32 accum)
    wsum = jnp.zeros((d.shape[0], 1), jnp.float32)
    for _ in range(K):                             # K == 3, static, unrolled
        kmin = jnp.min(keys, axis=-1, keepdims=True)           # single XLU reduction / neighbour
        mask = keys == kmin
        # recover distance (low mantissa bits carried the column; error <= 2^-(23-low_bits) rel.)
        dmin = pltpu.bitcast(kmin & keep, jnp.float32)
        w = pl.reciprocal(dmin + EPS_W, approx=True)            # EUP, (tn2, 1)
        sel = sel + jnp.where(mask, w, 0.0)                     # VPU broadcast-accumulate
        wsum = wsum + w
        keys = jnp.where(mask, sentinel, keys)

    # Single gather matmul for all K neighbours; bf16 operands feed the MXU at full rate
    # (sel has 3 nonzeros/row; f32 accumulation via preferred_element_type).
    interp = jnp.dot(sel.astype(jnp.bfloat16), f1_ref[...],
                     preferred_element_type=jnp.float32)        # (tn2, Cp)
    out_ref[...] = (interp * pl.reciprocal(wsum, approx=True) + f2).astype(out_ref.dtype)


def transition_up(xyz1, points1, xyz2, points2, params, dim_out, *,
                  tile_rows=1024, tile_n2=256):
    """xyz1:(B,N1,3) points1:(B,N1,dim1) xyz2:(B,N2,3) points2:(B,N2,dim2) -> (B,N2,dim_out)."""
    B, N1, _ = xyz1.shape
    _, N2, _ = xyz2.shape
    D1 = points1.shape[-1]
    D2 = points2.shape[-1]
    C = dim_out
    K = 3
    Cp = ((C + 127) // 128) * 128      # lane-dense channel padding (unmasked vst stores)
    f32 = jnp.float32
    bf16 = jnp.bfloat16
    out_dtype = points1.dtype
    Sq = pl.Squeezed()
    # TODO(synk): N1 < 3 and the S==1 "repeat" branch of PointNetFeaturePropagation are not
    #             handled; this kernel assumes at least 3 source points.

    vmem_phys = _vmem_capacity_bytes()
    vmem_budget = int(0.8 * vmem_phys)   # headroom for compiler-internal scratch
    # (v5e/v6e: ~102 MiB of 128; v7x: ~51 MiB of 64 -> tn2 auto-shrinks below)

    padC = lambda a: jnp.pad(a, [(0, 0)] * (a.ndim - 1) + [(0, Cp - a.shape[-1])])
    w1t = padC(params["w1"].T.astype(f32))          # (D1, Cp)
    w2t = padC(params["w2"].T.astype(f32))          # (D2, Cp)
    g1, be1 = padC(params["g1"].astype(f32)), padC(params["beta1"].astype(f32))
    g2, be2 = padC(params["g2"].astype(f32)), padC(params["beta2"].astype(f32))
    # Linear biases b1/b2 are intentionally not used: train-mode BN subtracts the batch mean,
    # which cancels any per-channel bias exactly.

    def linear_stats(x2d, wt):
        rows, D = x2d.shape
        tr = _pick_tile(rows, tile_rows, mult=16)   # 16: bf16 z tiles need 16-row sublanes
        nt = rows // tr
        z, st = pl.pallas_call(
            _linear_stats_kernel,
            grid=(nt,),
            in_specs=[pl.BlockSpec((tr, D), lambda i: (i, 0)),
                      pl.BlockSpec((D, Cp), lambda i: (0, 0))],
            out_specs=[pl.BlockSpec((tr, Cp), lambda i: (i, 0)),
                       pl.BlockSpec((Sq, 2, Cp), lambda i: (i, 0, 0))],
            out_shape=(jax.ShapeDtypeStruct((rows, Cp), bf16),
                       jax.ShapeDtypeStruct((nt, 2, Cp), f32)),
            compiler_params=pltpu.CompilerParams(
                dimension_semantics=("parallel",),   # per-tile partial stats -> megacore-safe
                vmem_limit_bytes=vmem_budget),
        )(x2d.astype(f32), wt)
        return z, jnp.sum(st, axis=0)                # tiny host-side tree reduction -> (2, Cp)

    z1, st1 = linear_stats(points1.reshape(B * N1, D1), w1t)
    z2, st2 = linear_stats(points2.reshape(B * N2, D2), w2t)

    def bn_scale_shift(st, g, be, rows):
        mean = st[0] / rows
        var = jnp.maximum(st[1] / rows - mean * mean, 0.0)      # single-pass (biased) variance
        scale = g * lax.rsqrt(var + EPS_BN)                     # gamma folded into the scale
        return scale, be - mean * scale

    sc1, sh1 = bn_scale_shift(st1, g1, be1, B * N1)
    sc2, sh2 = bn_scale_shift(st2, g2, be2, B * N2)
    bn_rows = jnp.stack([sc1, sh1, sc2, sh2], axis=0)           # (4, Cp) — one small DMA

    # Glue: augment coordinates so one matmul yields squared distances.
    dst, src = xyz2.astype(f32), xyz1.astype(f32)
    dst_aug = jnp.concatenate(
        [dst,
         jnp.sum(dst * dst, -1, keepdims=True),
         jnp.ones(dst.shape[:-1] + (1,), f32),
         jnp.zeros(dst.shape[:-1] + (3,), f32)], axis=-1)       # (B, N2, 8)
    src_aug = jnp.concatenate(
        [-2.0 * src,
         jnp.ones(src.shape[:-1] + (1,), f32),
         jnp.sum(src * src, -1, keepdims=True),
         jnp.zeros(src.shape[:-1] + (3,), f32)], axis=-1)       # (B, N1, 8)
    src_aug_t = jnp.transpose(src_aug, (0, 2, 1))               # (B, 8, N1)

    out_isz = jnp.dtype(out_dtype).itemsize

    def k2_vmem_bytes(tn2):
        fixed = (2 * N1 * Cp * 2        # z1 bf16 block (double-buffered by the pipeline)
                 + N1 * Cp * 2          # f1 bf16 VMEM scratch
                 + 2 * 8 * N1 * 4       # srcT block
                 + 2 * 4 * Cp * 4)      # bn block
        per = (2 * tn2 * Cp * 2         # z2 bf16 block
               + 2 * tn2 * Cp * out_isz # out block
               + 2 * tn2 * 8 * 4        # dst block
               + 8 * tn2 * N1 * 4       # in-kernel (tn2, N1) temporaries (d/col/keys/sel/...)
               + 3 * tn2 * Cp * 4)      # f2 / interp temporaries
        return fixed + per

    cands = _tile_candidates(N2, 16)                       # bf16 z2 tiles: 16-row sublanes
    cand_le = [t for t in cands if t <= tile_n2] or [cands[-1]]
    tn2 = next((t for t in cand_le if k2_vmem_bytes(t) <= vmem_budget), cand_le[-1])
    # TODO(synk): for very large N1 even the smallest tn2 can exceed the v7x budget;
    #             chunking N1 inside the kernel (running packed-key min) would be needed there.
    # Note: single-buffering the j-invariant z1/srcT blocks (pipeline_mode=pl.Buffered(1))
    #       would free more v7x VMEM; kept double-buffered here and accounted for above.

    low_bits = max((N1 - 1).bit_length(), 1)
    kern = functools.partial(_interp_kernel, K, low_bits)

    out = pl.pallas_call(
        kern,
        grid=(B, N2 // tn2),
        in_specs=[
            pl.BlockSpec((Sq, N1, Cp), lambda b, j: (b, 0, 0)),    # z1: per-batch, resident over j
            pl.BlockSpec((Sq, tn2, Cp), lambda b, j: (b, j, 0)),   # z2 tile
            pl.BlockSpec((Sq, tn2, 8), lambda b, j: (b, j, 0)),    # xyz2 augmented tile
            pl.BlockSpec((Sq, 8, N1), lambda b, j: (b, 0, 0)),     # xyz1 augmented^T, per batch
            pl.BlockSpec((4, Cp), lambda b, j: (0, 0)),            # packed BN scale/shift rows
        ],
        out_specs=pl.BlockSpec((Sq, tn2, Cp), lambda b, j: (b, j, 0)),
        out_shape=jax.ShapeDtypeStruct((B, N2, Cp), out_dtype),    # caller dtype: no XLA cast pass
        scratch_shapes=[pltpu.VMEM((N1, Cp), bf16)],               # f1 cache (filled at j==0)
        compiler_params=pltpu.CompilerParams(
            dimension_semantics=("parallel", "arbitrary"),         # j must be sequential (f1 cache)
            vmem_limit_bytes=vmem_budget),
    )(z1.reshape(B, N1, Cp), z2.reshape(B, N2, Cp), dst_aug, src_aug_t, bn_rows)

    if Cp == C:
        return out
    return out[:, :, :C]


def reference(xyz1, points1, xyz2, points2, params):
    """Pure-JAX reference mirroring the PyTorch forward (train-mode BN)."""
    def branch(x, W, b, g, be):
        z = jnp.einsum('bnd,cd->bnc', x, W) + b
        m = jnp.mean(z, axis=(0, 1), keepdims=True)
        v = jnp.mean((z - m) ** 2, axis=(0, 1), keepdims=True)
        return jax.nn.relu((z - m) / jnp.sqrt(v + EPS_BN) * g + be)

    f1 = branch(points1, params["w1"], params["b1"], params["g1"], params["beta1"])
    f2 = branch(points2, params["w2"], params["b2"], params["g2"], params["beta2"])
    d = jnp.sum((xyz2[:, :, None, :] - xyz1[:, None, :, :]) ** 2, -1)   # (B, N2, N1)
    negd, idx = lax.top_k(-d, 3)
    dists = -negd
    recip = 1.0 / (dists + EPS_W)
    w = recip / jnp.sum(recip, -1, keepdims=True)
    gathered = jax.vmap(lambda f, i: f[i])(f1, idx)                      # (B, N2, 3, C)
    interp = jnp.sum(gathered * w[..., None], axis=2)
    return interp + f2


if __name__ == "__main__":
    B, N1, N2 = 2, 16, 32
    dim1, dim2, dim_out = 32, 16, 64

    key = jax.random.PRNGKey(0)
    ks = jax.random.split(key, 12)
    xyz1 = jax.random.uniform(ks[0], (B, N1, 3), jnp.float32)
    xyz2 = jax.random.uniform(ks[1], (B, N2, 3), jnp.float32)
    points1 = jax.random.normal(ks[2], (B, N1, dim1), jnp.float32)
    points2 = jax.random.normal(ks[3], (B, N2, dim2), jnp.float32)

    params = {
        "w1": jax.random.normal(ks[4], (dim_out, dim1), jnp.float32) / jnp.sqrt(dim1),
        "b1": 0.1 * jax.random.normal(ks[5], (dim_out,), jnp.float32),
        "g1": 1.0 + 0.1 * jax.random.normal(ks[6], (dim_out,), jnp.float32),
        "beta1": 0.1 * jax.random.normal(ks[7], (dim_out,), jnp.float32),
        "w2": jax.random.normal(ks[8], (dim_out, dim2), jnp.float32) / jnp.sqrt(dim2),
        "b2": 0.1 * jax.random.normal(ks[9], (dim_out,), jnp.float32),
        "g2": 1.0 + 0.1 * jax.random.normal(ks[10], (dim_out,), jnp.float32),
        "beta2": 0.1 * jax.random.normal(ks[11], (dim_out,), jnp.float32),
    }

    # small tiles so multi-tile grids, the per-batch f1 cache, and index maps are exercised
    out = transition_up(xyz1, points1, xyz2, points2, params, dim_out,
                        tile_rows=16, tile_n2=16)
    out = jax.block_until_ready(out)

    ref = reference(xyz1, points1, xyz2, points2, params)
    assert out.shape == (B, N2, dim_out)
    np.testing.assert_allclose(np.asarray(out), np.asarray(ref), rtol=2e-2, atol=2e-2)
    print("KERNEL_OK")
</pallas_src>

<mosaic_0001>
module attributes {stable_mosaic.version = 11 : i64} {
  func.func @_linear_stats_kernel(%arg0: i32, %arg1: memref<16x32xf32, #tpu.memory_space<vmem>>, %arg2: memref<32x128xf32, #tpu.memory_space<vmem>>, %arg3: memref<16x128xbf16, #tpu.memory_space<vmem>>, %arg4: memref<1x2x128xf32, #tpu.memory_space<vmem>>) attributes {dimension_semantics = [#tpu.dimension_semantics<parallel>], iteration_bounds = array<i64: 2>, scalar_prefetch = 0 : i64, scratch_operands = 0 : i64, tpu.core_type = #tpu.core_type<tc>, window_params = [{transform_indices = @transform_0, window_bounds = array<i64: 16, 32>}, {pipeline_mode = #tpu.pipeline_mode<synchronous>, transform_indices = @transform_1, window_bounds = array<i64: 32, 128>}, {transform_indices = @transform_2, window_bounds = array<i64: 16, 128>}, {transform_indices = @transform_3, window_bounds = array<i64: 1, 2, 128>}]} {
    %c0 = arith.constant 0 : index
    %c0_0 = arith.constant 0 : index
    %0 = vector.load %arg1[%c0, %c0_0] : memref<16x32xf32, #tpu.memory_space<vmem>>, vector<16x32xf32>
    %c0_1 = arith.constant 0 : index
    %c0_2 = arith.constant 0 : index
    %1 = vector.load %arg2[%c0_1, %c0_2] : memref<32x128xf32, #tpu.memory_space<vmem>>, vector<32x128xf32>
    %cst = arith.constant dense<0.000000e+00> : vector<16x128xf32>
    %2 = tpu.matmul %0, %1, %cst {dimension_numbers = #tpu.dot_dimension_numbers<[1], [0], [0], [1], [0, 0, 1, 1], [], []>} : vector<16x32xf32>, vector<32x128xf32>, vector<16x128xf32> -> vector<16x128xf32>
    %3 = arith.truncf %2 : vector<16x128xf32> to vector<16x128xbf16>
    %c0_3 = arith.constant 0 : index
    %c0_4 = arith.constant 0 : index
    %4 = vector.load %arg3[%c0_3, %c0_4] : memref<16x128xbf16, #tpu.memory_space<vmem>>, vector<16x128xbf16>
    tpu.vector_store %arg3[%c0_3, %c0_4], %3 {strides = array<i32>} : memref<16x128xbf16, #tpu.memory_space<vmem>>, vector<16x128xbf16>,
    %cst_5 = arith.constant dense<0.000000e+00> : vector<128xf32>
    %5 = vector.multi_reduction <add>, %2, %cst_5 [0] : vector<16x128xf32> to vector<128xf32>
    %6 = vector.shape_cast %5 : vector<128xf32> to vector<1x128xf32>
    %7 = arith.mulf %2, %2 : vector<16x128xf32>
    %cst_6 = arith.constant dense<0.000000e+00> : vector<128xf32>
    %8 = vector.multi_reduction <add>, %7, %cst_6 [0] : vector<16x128xf32> to vector<128xf32>
    %9 = vector.shape_cast %8 : vector<128xf32> to vector<1x128xf32>
    %10 = tpu.concatenate %6, %9 in 0 : vector<1x128xf32>, vector<1x128xf32> -> vector<2x128xf32>
    %c0_7 = arith.constant 0 : index
    %c0_8 = arith.constant 0 : index
    %c0_9 = arith.constant 0 : index
    %11 = vector.load %arg4[%c0_7, %c0_8, %c0_9] : memref<1x2x128xf32, #tpu.memory_space<vmem>>, vector<1x2x128xf32>
    %12 = vector.shape_cast %11 : vector<1x2x128xf32> to vector<2x128xf32>
    %13 = vector.shape_cast %10 : vector<2x128xf32> to vector<1x2x128xf32>
    tpu.vector_store %arg4[%c0_7, %c0_8, %c0_9], %13 {strides = array<i32>} : memref<1x2x128xf32, #tpu.memory_space<vmem>>, vector<1x2x128xf32>,
    return
  }
  func.func @transform_0(%arg0: i32) -> (i32, i32) {
    %c0_i32 = arith.constant 0 : i32
    %c0_i32_0 = arith.constant 0 : i32
    return %arg0, %c0_i32 : i32, i32
  }
  func.func @transform_1(%arg0: i32) -> (i32, i32) {
    %c0_i32 = arith.constant 0 : i32
    %c0_i32_0 = arith.constant 0 : i32
    %c0_i32_1 = arith.constant 0 : i32
    return %c0_i32, %c0_i32_0 : i32, i32
  }
  func.func @transform_2(%arg0: i32) -> (i32, i32) {
    %c0_i32 = arith.constant 0 : i32
    %c0_i32_0 = arith.constant 0 : i32
    return %arg0, %c0_i32 : i32, i32
  }
  func.func @transform_3(%arg0: i32) -> (i32, i32, i32) {
    %c0_i32 = arith.constant 0 : i32
    %c0_i32_0 = arith.constant 0 : i32
    %c0_i32_1 = arith.constant 0 : i32
    return %arg0, %c0_i32, %c0_i32_0 : i32, i32, i32
  }
}

</mosaic_0001>

<llo_original>
// kernel: tpu_custom_call.1
$region0: #{tpu_custom_call.1}
  #allocation0 [shape = 'u32[]', space=smem, size = 0x4, offset = 0x4, fixed_abs, tag = 'smem constant byte address 0x4 - core index']
  #allocation1 [shape = 'u32[144,128]{1,0:T(1,128)}', space=vmem, size = 0x12000, scoped, tag = 'internal scratch']
  %s0 = inlined_call_operand.hbm [shape: f32[32,32], index: 0, kind: input, shape index: {}]
  %s1 = inlined_call_operand.hbm [shape: f32[32,128], index: 1, kind: input, shape index: {}]
  %s2 = inlined_call_operand.hbm [shape: bf16[32,128], index: 2, kind: output, shape index: {0}]
  %s3 = inlined_call_operand.hbm [shape: f32[2,2,128], index: 3, kind: output, shape index: {1}]
  %4 = xla_tuple %s2, %s3
  %s5 = sld [smem:[#allocation0]]
  $region57: #{tpu_custom_call.1} parent=0
    _
  %s7 = ssub.s32 1, %s5
  %s8 = scalar_select 0, %s7, %s5
  $region1: #{tpu_custom_call.1} parent=0
    #allocation2 [shape = 'u8[16384]{0}', space=vmem, size = 0x4000, scoped, tag = 'input window, operand 0']
    #allocation3 [shape = 's32[2]{0}', space=sflag, size = 0x8, scoped, tag = 'scoped memory for tpu_custom_call.1']
    #allocation4 [shape = 's32[2]{0}', space=sflag, size = 0x8, scoped, tag = 'scoped memory for tpu_custom_call.1']
    #allocation5 [shape = 'u8[16384]{0}', space=vmem, size = 0x4000, scoped, tag = 'input window, operand 1, single buffered']
    #allocation6 [shape = 's32[1]{0}', space=sflag, size = 0x4, scoped, tag = 'scoped memory for tpu_custom_call.1']
    #allocation7 [shape = 'u8[8192]{0}', space=vmem, size = 0x2000, scoped, tag = 'output window, operand 0']
    #allocation8 [shape = 'u8[2048]{0}', space=vmem, size = 0x800, scoped, tag = 'output window, operand 1']
    #allocation9 [shape = 's32[2]{0}', space=sflag, size = 0x8, scoped, tag = 'scoped memory for tpu_custom_call.1']
    %9 = vsyncpa [#allocation3], 0
    %s10 = scalar_lea.sflag [#allocation3], 1
    %11 = vsyncpa %s10, 0
    %12 = vsyncpa [#allocation6], 0
    %13 = vsyncpa [#allocation4], 0
    %s14 = scalar_lea.sflag [#allocation4], 1
    %15 = vsyncpa %s14, 0
    %16 = vsyncpa [#allocation9], 0
    %s17 = scalar_lea.sflag [#allocation9], 1
    %18 = vsyncpa %s17, 0
    loop: start=0, step=1, limit=4
    $region2: #{tpu_custom_call.1} parent=1 // loop_pre_header
      _
    $region3: #{tpu_custom_call.1} parent=1 // loop_header
      %s20 = sphi 0, %s24
      %p21 = scmp.ge.s32.totalorder %s20, 4
      %s30 = sphi 0, %s32
      %s33 = sphi 0, %s30
      %s34 = sphi 0, %s33
      %s50 = sphi 0, %s34
      %s54 = sphi 0, %s54
      %s56 = sphi 0, %s54
      %s57 = sphi 0, %s56
      %s71 = sphi 0, %s57
      %s77 = sphi 0, %s79
      %s80 = sphi 0, %s77
      %s81 = sphi 0, %s80
      %s97 = sphi 0, %s81
      %s103 = sphi 0, %s105
      %s106 = sphi 0, %s103
      %s107 = sphi 0, %s106
      %s123 = sphi 0, %s107
    $region4: #{tpu_custom_call.1} parent=1 // loop_header_branch
      %23 = sbr.rel (%p21) target = $region8
    $region5: #{tpu_custom_call.1} parent=1 // loop_body
      %s25 = ssub.s32 %s20, 1
      %s26 = ssub.s32 %s20, 2
      %s27 = sadd.s32 %s20, 1
      %s28 = ssub.s32 %s20, %s27
      %p29 = scmp.eq.s32.totalorder %s28, 0
      %s31 = sadd.s32 %s30, 1
      %s32 = scalar_select %p29, %s30, %s31
      %p35 = pneg %p29
      %p36 = scmp.eq.s32.totalorder %s20, 1
      %p37 = por %p35, %p36
      %p38 = scmp.ne.s32.totalorder %s30, %s33
      %p39 = scmp.eq.s32.totalorder %s20, 0
      %p40 = por %p38, %p39
      %p41 = scmp.ne.s32.totalorder %s30, %s33
      %p42 = scmp.eq.s32.totalorder %s25, 1
      %p43 = por %p41, %p42
      %p44 = scmp.ne.s32.totalorder %s33, %s34
      %p45 = scmp.eq.s32.totalorder %s25, 0
      %p46 = por %p44, %p45
      %p47 = scmp.ne.s32.totalorder %s33, %s34
      %p48 = scmp.eq.s32.totalorder %s26, 1
      %p49 = por %p47, %p48
      %p51 = scmp.ne.s32.totalorder %s34, %s50
      %p52 = scmp.eq.s32.totalorder %s26, 0
      %p53 = por %p51, %p52
      %s55 = sadd.s32 %s54, 1
      %p58 = scmp.eq.s32.totalorder %s20, 1
      %p59 = scmp.ne.s32.totalorder %s54, %s56
      %p60 = scmp.eq.s32.totalorder %s20, 0
      %p61 = por %p59, %p60
      %p62 = scmp.ne.s32.totalorder %s54, %s56
      %p63 = scmp.eq.s32.totalorder %s25, 1
      %p64 = por %p62, %p63
      %p65 = scmp.ne.s32.totalorder %s56, %s57
      %p66 = scmp.eq.s32.totalorder %s25, 0
      %p67 = por %p65, %p66
      %p68 = scmp.ne.s32.totalorder %s56, %s57
      %p69 = scmp.eq.s32.totalorder %s26, 1
      %p70 = por %p68, %p69
      %p72 = scmp.ne.s32.totalorder %s57, %s71
      %p73 = scmp.eq.s32.totalorder %s26, 0
      %p74 = por %p72, %p73
      %s75 = ssub.s32 %s20, %s27
      %p76 = scmp.eq.s32.totalorder %s75, 0
      %s78 = sadd.s32 %s77, 1
      %s79 = scalar_select %p76, %s77, %s78
      %p82 = pneg %p76
      %p83 = scmp.eq.s32.totalorder %s20, 1
      %p84 = por %p82, %p83
      %p85 = scmp.ne.s32.totalorder %s77, %s80
      %p86 = scmp.eq.s32.totalorder %s20, 0
      %p87 = por %p85, %p86
      %p88 = scmp.ne.s32.totalorder %s77, %s80
      %p89 = scmp.eq.s32.totalorder %s25, 1
      %p90 = por %p88, %p89
      %p91 = scmp.ne.s32.totalorder %s80, %s81
      %p92 = scmp.eq.s32.totalorder %s25, 0
      %p93 = por %p91, %p92
      %p94 = scmp.ne.s32.totalorder %s80, %s81
      %p95 = scmp.eq.s32.totalorder %s26, 1
      %p96 = por %p94, %p95
      %p98 = scmp.ne.s32.totalorder %s81, %s97
      %p99 = scmp.eq.s32.totalorder %s26, 0
      %p100 = por %p98, %p99
      %s101 = ssub.s32 %s20, %s27
      %p102 = scmp.eq.s32.totalorder %s101, 0
      %s104 = sadd.s32 %s103, 1
      %s105 = scalar_select %p102, %s103, %s104
      %p108 = pneg %p102
      %p109 = scmp.eq.s32.totalorder %s20, 1
      %p110 = por %p108, %p109
      %p111 = scmp.ne.s32.totalorder %s103, %s106
      %p112 = scmp.eq.s32.totalorder %s20, 0
      %p113 = por %p111, %p112
      %p114 = scmp.ne.s32.totalorder %s103, %s106
      %p115 = scmp.eq.s32.totalorder %s25, 1
      %p116 = por %p114, %p115
      %p117 = scmp.ne.s32.totalorder %s106, %s107
      %p118 = scmp.eq.s32.totalorder %s25, 0
      %p119 = por %p117, %p118
      %p120 = scmp.ne.s32.totalorder %s106, %s107
      %p121 = scmp.eq.s32.totalorder %s26, 1
      %p122 = por %p120, %p121
      %p124 = scmp.ne.s32.totalorder %s107, %s123
      %p125 = scmp.eq.s32.totalorder %s26, 0
      %p126 = por %p124, %p125
      %p127 = scmp.le.s32.totalorder 1, %s20
      %p128 = scmp.lt.s32.totalorder %s20, 3
      %p129 = pnand %p127, %p128
      %p130 = pneg %p129
      // Predicated region
      $region9: #{tpu_custom_call.1} parent=5 // pred_check
        _
      $region10: #{tpu_custom_call.1} parent=5 // pred_check_branch
        %132 = sbr.rel (%p129) target = $region12
      $region11: #{tpu_custom_call.1} parent=5 // pred_region
        %s133 = ssub.s32 %s20, 1
        // Predicated region
        $region13: #{tpu_custom_call.1} parent=11 // pred_check
          %p134 = pneg %p67
        $region14: #{tpu_custom_call.1} parent=11 // pred_check_branch
          %136 = sbr.rel (%p134) target = $region16
        $region15: #{tpu_custom_call.1} parent=11 // pred_region
          %s138 = ssub.s32 512, 512
          %139 = vsyncadd [#allocation6], %s138
          %s140 = sshll.u32 [#allocation5], 4
          %s141 = int_to_ptr.vmem [resolvable:$true] %s140
          %146 = dma.hbm_to_vmem [thread:$0]  %s1, 512, %s141, [#allocation6], 128, 128, 8
        $region16: #{tpu_custom_call.1} parent=11 // pred_fallthru
          _
      $region12: #{tpu_custom_call.1} parent=5 // pred_fallthru
        _
      %p147 = scmp.lt.s32.totalorder %s20, 2
      // Predicated region
      $region17: #{tpu_custom_call.1} parent=5 // pred_check
        %p148 = pneg %p147
      $region18: #{tpu_custom_call.1} parent=5 // pred_check_branch
        %150 = sbr.rel (%p148) target = $region20
      $region19: #{tpu_custom_call.1} parent=5 // pred_region
        // Predicated region
        $region21: #{tpu_custom_call.1} parent=19 // pred_check
          %p151 = pneg %p40
        $region22: #{tpu_custom_call.1} parent=19 // pred_check_branch
          %153 = sbr.rel (%p151) target = $region24
        $region23: #{tpu_custom_call.1} parent=19 // pred_region
          %s154 = sand.u32 %s30, 1
          %s155 = scalar_lea.sflag [#allocation3], %s154
          %s156 = sand.u32 %s30, 1
          %s157 = smul.addr %s156, 16
          %s158 = scalar_lea.vmem [#allocation2], %s157
          %s159 = smul.u32 2, %s20
          %s161 = ssub.s32 256, 256
          %162 = vsyncadd %s155, %s161
          %s163 = smul.addr %s159, 128
          %s164 = scalar_lea.hbm %s0, %s163
          %s165 = sshll.u32 %s158, 4
          %s166 = int_to_ptr.vmem [resolvable:$true] %s165
          %171 = dma.hbm_to_vmem [thread:$0]  %s164, 256, %s166, %s155, 128, 128, 8
        $region24: #{tpu_custom_call.1} parent=19 // pred_fallthru
          _
      $region20: #{tpu_custom_call.1} parent=5 // pred_fallthru
        _
      %p172 = scmp.le.s32.totalorder 1, %s20
      %p173 = scmp.lt.s32.totalorder %s20, 3
      %p174 = pnand %p172, %p173
      %p175 = pneg %p174
      // Predicated region
      $region25: #{tpu_custom_call.1} parent=5 // pred_check
        _
      $region26: #{tpu_custom_call.1} parent=5 // pred_check_branch
        %177 = sbr.rel (%p174) target = $region28
      $region27: #{tpu_custom_call.1} parent=5 // pred_region
        %s178 = ssub.s32 %s20, 1
        %s179 = sand.u32 %s33, 1
        %s180 = scalar_lea.sflag [#allocation3], %s179
        %s181 = sand.u32 %s33, 1
        %s182 = smul.addr %s181, 16
        %s183 = scalar_lea.vmem [#allocation2], %s182
        // Predicated region
        $region29: #{tpu_custom_call.1} parent=27 // pred_check
          %p184 = pneg %p46
        $region30: #{tpu_custom_call.1} parent=27 // pred_check_branch
          %186 = sbr.rel (%p184) target = $region32
        $region31: #{tpu_custom_call.1} parent=27 // pred_region
          %187 = dma.done %s180, 256
        $region32: #{tpu_custom_call.1} parent=27 // pred_fallthru
          _
        // Predicated region
        $region33: #{tpu_custom_call.1} parent=27 // pred_check
          %p188 = pneg %p67
        $region34: #{tpu_custom_call.1} parent=27 // pred_check_branch
          %190 = sbr.rel (%p188) target = $region36
        $region35: #{tpu_custom_call.1} parent=27 // pred_region
          %191 = dma.done [#allocation6], 512
        $region36: #{tpu_custom_call.1} parent=27 // pred_fallthru
          _
        %s192 = sand.u32 %s33, 1
        %s193 = scalar_lea.sflag [#allocation3], %s192
        %s194 = sand.u32 %s33, 1
        %s195 = smul.addr %s194, 16
        %s196 = scalar_lea.vmem [#allocation2], %s195
        %p197 = pneg %p46
        %p198 = pneg %p43
        %p199 = pneg %p67
        %p200 = pneg %p64
        %p201 = pneg %p93
        %p202 = pneg %p90
        %s203 = sand.u32 %s80, 1
        %s204 = scalar_lea.sflag [#allocation4], %s203
        %s205 = sand.u32 %s80, 1
        %s206 = smul.addr %s205, 8
        %s207 = scalar_lea.vmem [#allocation7], %s206
        %p208 = pneg %p119
        %p209 = pneg %p116
        %s210 = sand.u32 %s106, 1
        %s211 = scalar_lea.sflag [#allocation9], %s210
        %s212 = sand.u32 %s106, 1
        %s213 = smul.addr %s212, 2
        %s214 = scalar_lea.vmem [#allocation8], %s213
        %s215 = smul.u32 2, %s25
        %s216 = smul.u32 2, %s25
        %v217 = vld [vmem:[%s183] sm:$0xff]
        %v218 = vld [vmem:[%s183 + $0x8] sm:$0xff]
        %v219 = vld [vmem:[#allocation5] sm:$0xff]
        %v220 = vld [vmem:[#allocation5 + $0x8] sm:$0xff]
        %v221 = vld [vmem:[#allocation5 + $0x10] sm:$0xff]
        %v222 = vld [vmem:[#allocation5 + $0x18] sm:$0xff]
        %vm223 = vcmask 261120
        %v225 = vsel %vm223, %v217, 0
        %v228 = vsel %vm223, %v218, 0
        %230 = vmatprep.subr.mxu0 0.0
        %231 = vmatpush1.msra.mxu0 %v219
        %232 = vmatprep.subr.mxu0 0.0
        %233 = vmatpush1.msra.mxu0 %v220
        %234 = vmatprep.subr.mxu0 0.0
        %235 = vmatpush1.msra.mxu0 %v221
        %236 = vmatprep.subr.mxu0 0.0
        %237 = vmatpush1.msra.mxu0 %v222
        %238 = vmatprep.subr.mxu0 0.0
        %239 = vmatpush1.msra.mxu0 0.0
        %240 = vmatprep.subr.mxu0 0.0
        %241 = vmatpush1.msra.mxu0 0.0
        %242 = vmatprep.subr.mxu0 0.0
        %243 = vmatpush1.msra.mxu0 0.0
        %244 = vmatprep.subr.mxu0 0.0
        %245 = vmatpush1.msra.mxu0 0.0
        %246 = vmatprep.subr.mxu0 0.0
        %247 = vmatpush1.msra.mxu0 0.0
        %248 = vmatprep.subr.mxu0 0.0
        %249 = vmatpush1.msra.mxu0 0.0
        %250 = vmatprep.subr.mxu0 0.0
        %251 = vmatpush1.msra.mxu0 0.0
        %252 = vmatprep.subr.mxu0 0.0
        %253 = vmatpush1.msra.mxu0 0.0
        %254 = vmatprep.subr.mxu0 0.0
        %255 = vmatpush1.msra.mxu0 0.0
        %256 = vmatprep.subr.mxu0 0.0
        %257 = vmatpush1.msra.mxu0 0.0
        %258 = vmatprep.subr.mxu0 0.0
        %259 = vmatpush1.msra.mxu0 0.0
        %260 = vmatprep.subr.mxu0 0.0
        %261 = vmatpush1.msra.mxu0 0.0
        %262 = vmatprep.subr.mxu0 0.0
        %263 = vmatpush1.msra.mxu0 0.0
        %264 = vmatprep.subr.mxu0 0.0
        %265 = vmatpush1.msra.mxu0 0.0
        %266 = vmatprep.subr.mxu0 0.0
        %267 = vmatpush1.msra.mxu0 0.0
        %268 = vmatprep.subr.mxu0 0.0
        %269 = vmatpush1.msra.mxu0 0.0
        %270 = vmatprep.subr.mxu0 0.0
        %271 = vmatpush1.msra.mxu0 0.0
        %272 = vmatprep.subr.mxu0 0.0
        %273 = vmatpush1.msra.mxu0 0.0
        %274 = vmatprep.subr.mxu0 0.0
        %275 = vmatpush1.msra.mxu0 0.0
        %276 = vmatprep.subr.mxu0 0.0
        %277 = vmatpush1.msra.mxu0 0.0
        %278 = vmatprep.subr.mxu0 0.0
        %279 = vmatpush1.msra.mxu0 0.0
        %280 = vmatprep.subr.mxu0 0.0
        %281 = vmatpush1.msra.mxu0 0.0
        %282 = vmatprep.subr.mxu0 0.0
        %283 = vmatpush1.msra.mxu0 0.0
        %284 = vmatprep.subr.mxu0 0.0
        %285 = vmatpush1.msra.mxu0 0.0
        %286 = vmatprep.subr.mxu0 0.0
        %287 = vmatpush1.msra.mxu0 0.0
        %288 = vmatprep.subr.mxu0 0.0
        %289 = vmatpush1.msra.mxu0 0.0
        %290 = vmatprep.subr.mxu0 0.0
        %291 = vmatpush1.msra.mxu0 0.0
        %292 = vmatprep.subr.mxu0 0.0
        %293 = vmatpush1.msra.mxu0 0.0
        %294 = vmatprep.mubr.f32.mxu0 0.0
        %295 = vmatmul.mubr.f32.gmra.mrb[0].mxu0 %v225
        %v296 = vpop.f32.mrb[0].mxu0
        %v297 = vadd.f32 0.0, %v296
        %v298 = vpop.f32.mrb[0].mxu0
        %299 = vmatprep.mubr.f32.mxu0 0.0
        %300 = vmatmul.mubr.f32.gmra.mrb[0].mxu0 %v228
        %v301 = vpop.f32.mrb[0].mxu0
        %v302 = vadd.f32 0.0, %v301
        %v303 = vpop.f32.mrb[0].mxu0
        %304 = vdwg.mxu0
        %v305 = vpack.c.bf16 %v302, %v297
        %v307 = vunpack.c.l.b16 %v305
        %v308 = vunpack.c.h.b16 %v305
        %v309 = vpack.c.b16 %v307, %v307
        %v310 = vpack.c.b16 %v308, %v308
        %313 = vst [vmem:[%s207] sm:$0xf] %v309
        %314 = vst [vmem:[%s207 + $0x4] sm:$0xf] %v310
        %v315 = vadd.f32 %v297, %v302
        %v316 = vrot.slane %v315, 4
        %v317 = vadd.f32 %v315, %v316
        %v318 = vrot.slane %v317, 2
        %v319 = vadd.f32 %v317, %v318
        %v320 = vrot.slane %v319, 1
        %v321 = vadd.f32 %v319, %v320
        %v322 = vmul.f32 %v297, %v297
        %v323 = vmul.f32 %v302, %v302
        %v324 = vadd.f32 %v322, %v323
        %v325 = vrot.slane %v324, 4
        %v326 = vadd.f32 %v324, %v325
        %v327 = vrot.slane %v326, 2
        %v328 = vadd.f32 %v326, %v327
        %v329 = vrot.slane %v328, 1
        %v330 = vadd.f32 %v328, %v329
        %vm331 = vcmask 1040384
        %v332 = vsel %vm331, %v321, %v330
        %333 = vst [vmem:[%s214] sm:$0x3] %v332
        %s334 = sand.u32 %s80, 1
        %s335 = scalar_lea.sflag [#allocation4], %s334
        %s336 = sand.u32 %s80, 1
        %s337 = smul.addr %s336, 8
        %s338 = scalar_lea.vmem [#allocation7], %s337
        %s339 = sand.u32 %s106, 1
        %s340 = scalar_lea.sflag [#allocation9], %s339
        %s341 = sand.u32 %s106, 1
        %s342 = smul.addr %s341, 2
        %s343 = scalar_lea.vmem [#allocation8], %s342
        // Predicated region
        $region37: #{tpu_custom_call.1} parent=27 // pred_check
          %p344 = pneg %p90
        $region38: #{tpu_custom_call.1} parent=27 // pred_check_branch
          %346 = sbr.rel (%p344) target = $region40
        $region39: #{tpu_custom_call.1} parent=27 // pred_region
          %s347 = smul.u32 2, %s25
          %s349 = ssub.s32 128, 128
          %350 = vsyncadd %s335, %s349
          %s351 = smul.addr %s347, 64
          %s352 = scalar_lea.hbm %s2, %s351
          %s353 = sshll.u32 %s338, 4
          %s354 = int_to_ptr.vmem [resolvable:$true] %s353
          %359 = dma.vmem_to_hbm [thread:$0]  %s354, 128, %s352, %s335, 64, 64, 4
        $region40: #{tpu_custom_call.1} parent=27 // pred_fallthru
          _
        // Predicated region
        $region41: #{tpu_custom_call.1} parent=27 // pred_check
          %p360 = pneg %p116
        $region42: #{tpu_custom_call.1} parent=27 // pred_check_branch
          %362 = sbr.rel (%p360) target = $region44
        $region43: #{tpu_custom_call.1} parent=27 // pred_region
          %s364 = ssub.s32 32, 32
          %365 = vsyncadd %s340, %s364
          %s366 = smul.addr %s25, 32
          %s367 = scalar_lea.hbm %s3, %s366
          %s369 = sshll.u32 %s343, 4
          %s370 = int_to_ptr.vmem [resolvable:$true] %s369
          %372 = dma.vmem_to_hbm [thread:$0]  %s370, 32, %s367, %s340
        $region44: #{tpu_custom_call.1} parent=27 // pred_fallthru
          _
      $region28: #{tpu_custom_call.1} parent=5 // pred_fallthru
        _
      %p373 = scmp.le.s32.totalorder 2, %s20
      // Predicated region
      $region45: #{tpu_custom_call.1} parent=5 // pred_check
        %p374 = pneg %p373
      $region46: #{tpu_custom_call.1} parent=5 // pred_check_branch
        %376 = sbr.rel (%p374) target = $region48
      $region47: #{tpu_custom_call.1} parent=5 // pred_region
        %s377 = ssub.s32 %s20, 2
        // Predicated region
        $region49: #{tpu_custom_call.1} parent=47 // pred_check
          %p378 = pneg %p96
        $region50: #{tpu_custom_call.1} parent=47 // pred_check_branch
          %380 = sbr.rel (%p378) target = $region52
        $region51: #{tpu_custom_call.1} parent=47 // pred_region
          %s381 = sand.u32 %s81, 1
          %s382 = scalar_lea.sflag [#allocation4], %s381
          %s383 = sand.u32 %s81, 1
          %s384 = smul.addr %s383, 8
          %s385 = scalar_lea.vmem [#allocation7], %s384
          %386 = dma.done %s382, 128
        $region52: #{tpu_custom_call.1} parent=47 // pred_fallthru
          _
        // Predicated region
        $region53: #{tpu_custom_call.1} parent=47 // pred_check
          %p387 = pneg %p122
        $region54: #{tpu_custom_call.1} parent=47 // pred_check_branch
          %389 = sbr.rel (%p387) target = $region56
        $region55: #{tpu_custom_call.1} parent=47 // pred_region
          %s390 = sand.u32 %s107, 1
          %s391 = scalar_lea.sflag [#allocation9], %s390
          %s392 = sand.u32 %s107, 1
          %s393 = smul.addr %s392, 2
          %s394 = scalar_lea.vmem [#allocation8], %s393
          %395 = dma.done %s391, 32
        $region56: #{tpu_custom_call.1} parent=47 // pred_fallthru
          _
      $region48: #{tpu_custom_call.1} parent=5 // pred_fallthru
        _
    $region6: #{tpu_custom_call.1} parent=1 // loop_footer
      %s24 = sadd.s32 1, %s20
    $region7: #{tpu_custom_call.1} parent=1 // loop_footer_branch
      %19 = sbr.rel target = $region3
    $region8: #{tpu_custom_call.1} parent=1 // loop_exit
      _
    %396 = vsyncpa [#allocation3], 1
    %s397 = scalar_lea.sflag [#allocation3], 1
    %398 = vsyncpa %s397, 1
    %399 = vsyncpa [#allocation6], 1
    %400 = vsyncpa [#allocation4], 1
    %s401 = scalar_lea.sflag [#allocation4], 1
    %402 = vsyncpa %s401, 1
    %403 = vsyncpa [#allocation9], 1
    %s404 = scalar_lea.sflag [#allocation9], 1
    %405 = vsyncpa %s404, 1

</llo_original>
